<compile_context>
chip_gen: v6e
topology: v6e:2x2x1
jax: 0.10.0
libtpu: 0.0.40
codegen_flags: <defaults>
</compile_context>

<pallas_src>
import jax
import jax.numpy as jnp
from jax import lax
from jax.experimental import pallas as pl
from jax.experimental.pallas import tpu as pltpu

_DIMS = [128, 64, 32, 16, 8, 4, 2]
_FLOPS_PER_ROW = 2 * sum(_DIMS[i] * _DIMS[i + 1] for i in range(6))


def _round_up(n, m):
    return ((n + m - 1) // m) * m


def _pick_tile(B, tile_b):
    """Batch-tile size.  Lane-dense (2, tb) output blocks require tb to be a
    multiple of 128 when gridding (256 used for MXU friendliness); small
    batches use a single full-extent block."""
    tb_req = max(256, (tile_b // 256) * 256)
    if B > tb_req:
        return tb_req
    if B >= 512:
        # Keep at least 2 grid steps so v7x's 2 TensorCores both get work.
        return _round_up(-(-B // 2), 256)
    return B


def _mlp_kernel(x_ref,
                w1, b1, w2, b2, w3, b3, w4, b4, w5, b5, w6, b6,
                o_ref):
    # x tile: (TILE_B, 128) f32.  w1: (64, 128) f32, w2..w6: (out, in) bf16,
    # biases: (out, 1) f32.  Output: (2, TILE_B) f32.
    #
    # Layer 1 (128->64): contract x's feature dim directly (q @ k^T pattern)
    # so the result is already feature-major (64, TILE_B) -> lane-dense.
    # Kept in f32 both for accuracy and so x never needs a cast pass.
    h32 = lax.dot_general(
        w1[...], x_ref[...],
        dimension_numbers=(((1,), (1,)), ((), ())),
        preferred_element_type=jnp.float32)
    h = jnp.maximum(h32 + b1[...], 0.0).astype(jnp.bfloat16)

    # Layers 2-5 (feature-major): every intermediate is (out_dim, TILE_B), so
    # bias/ReLU/cast and MXU result pops stay on dense vregs.
    # TODO(synk): per perf review, if the bundle dump shows the 16->8 / 8->4 /
    # 4->2 dots emitting mostly-padded MXU pushes, swap them for VPU MACs.
    for w, b in ((w2, b2), (w3, b3), (w4, b4), (w5, b5)):
        acc = jnp.dot(w[...], h, preferred_element_type=jnp.float32) + b[...]
        h = jnp.maximum(acc, 0.0).astype(jnp.bfloat16)

    # Layer 6 (4->2), linear; lane-dense (2, TILE_B) store.
    o_ref[...] = (jnp.dot(w6[...], h, preferred_element_type=jnp.float32)
                  + b6[...]).astype(o_ref.dtype)


def neuro_quantum_bridge(x, params, *, tile_b=8192):
    """x: (B, 128).  params: list of 6 (w, b) with w: (out, in), b: (out, 1)."""
    B, F = x.shape
    assert F == _DIMS[0], f"expected {_DIMS[0]} input features, got {F}"

    tb = _pick_tile(B, tile_b)
    grid = (pl.cdiv(B, tb),)

    # Weights/biases: full-array blocks with constant index_maps -> DMA'd once,
    # VMEM-resident across all batch tiles (~40 KiB total).
    flat = []
    flat_specs = []
    for li, (w, b) in enumerate(params):
        w_k = w.astype(jnp.float32) if li == 0 else w.astype(jnp.bfloat16)
        flat.append(w_k)
        flat_specs.append(pl.BlockSpec(w_k.shape, lambda i: (0, 0)))
        flat.append(b.astype(jnp.float32))
        flat_specs.append(pl.BlockSpec(b.shape, lambda i: (0, 0)))

    weight_bytes = sum(int(a.size) * a.dtype.itemsize for a in flat)
    cost = pl.CostEstimate(
        flops=B * _FLOPS_PER_ROW,
        transcendentals=0,
        bytes_accessed=B * F * 4 + B * 2 * 4 + weight_bytes,
    )

    out_t = pl.pallas_call(
        _mlp_kernel,
        grid=grid,
        out_shape=jax.ShapeDtypeStruct((2, B), jnp.float32),
        in_specs=[pl.BlockSpec((tb, F), lambda i: (i, 0))] + flat_specs,
        out_specs=pl.BlockSpec((2, tb), lambda i: (0, i)),
        compiler_params=pltpu.CompilerParams(
            dimension_semantics=("parallel",),
            vmem_limit_bytes=32 * 1024 * 1024,
        ),
        cost_estimate=cost,
    )(x.astype(jnp.float32), *flat)

    # Tiny (2, B) -> (B, 2) transpose outside the kernel (negligible bytes).
    return out_t.T


def init_params(key):
    """Deterministic PyTorch-style (Kaiming-uniform-ish) init for fc1..fc6.
    Weights stored (out, in) like nn.Linear; biases stored (out, 1)."""
    params = []
    for i in range(6):
        fan_in, fan_out = _DIMS[i], _DIMS[i + 1]
        key, kw, kb = jax.random.split(key, 3)
        bound = 1.0 / (fan_in ** 0.5)
        w = jax.random.uniform(kw, (fan_out, fan_in), jnp.float32, -bound, bound)
        b = jax.random.uniform(kb, (fan_out, 1), jnp.float32, -bound, bound)
        params.append((w, b))
    return params


def reference_forward(x, params):
    h = x
    for i, (w, b) in enumerate(params):
        h = h @ w.T + b[:, 0]
        if i < 5:
            h = jnp.maximum(h, 0.0)
    return h


if __name__ == "__main__":
    key = jax.random.PRNGKey(0)
    params = init_params(key)

    # Small single-block batch.
    key, kx = jax.random.split(key)
    B = 8
    x = jax.random.normal(kx, (B, 128), jnp.float32)
    out = jax.block_until_ready(neuro_quantum_bridge(x, params))
    ref = reference_forward(x, params)
    assert out.shape == (B, 2), out.shape
    # Layer 1 is f32; layers 2-6 use bf16 weights with f32 accumulation.
    assert jnp.allclose(out, ref, atol=2e-2, rtol=2e-2), "mismatch vs reference"

    # Gridded + ragged path: two 256-row batch tiles with a 77-row tail block.
    key, kx2 = jax.random.split(key)
    B2 = 333
    x2 = jax.random.normal(kx2, (B2, 128), jnp.float32)
    out2 = jax.block_until_ready(neuro_quantum_bridge(x2, params, tile_b=256))
    ref2 = reference_forward(x2, params)
    assert out2.shape == (B2, 2), out2.shape
    assert jnp.allclose(out2, ref2, atol=2e-2, rtol=2e-2), "mismatch vs reference (gridded)"

    print("KERNEL_OK")
</pallas_src>

<mosaic_0001>
module attributes {stable_mosaic.version = 11 : i64} {
  func.func @_mlp_kernel(%arg0: i32, %arg1: memref<8x128xf32, #tpu.memory_space<vmem>>, %arg2: memref<64x128xf32, #tpu.memory_space<vmem>>, %arg3: memref<64x1xf32, #tpu.memory_space<vmem>>, %arg4: memref<32x64xbf16, #tpu.memory_space<vmem>>, %arg5: memref<32x1xf32, #tpu.memory_space<vmem>>, %arg6: memref<16x32xbf16, #tpu.memory_space<vmem>>, %arg7: memref<16x1xf32, #tpu.memory_space<vmem>>, %arg8: memref<8x16xbf16, #tpu.memory_space<vmem>>, %arg9: memref<8x1xf32, #tpu.memory_space<vmem>>, %arg10: memref<4x8xbf16, #tpu.memory_space<vmem>>, %arg11: memref<4x1xf32, #tpu.memory_space<vmem>>, %arg12: memref<2x4xbf16, #tpu.memory_space<vmem>>, %arg13: memref<2x1xf32, #tpu.memory_space<vmem>>, %arg14: memref<2x8xf32, #tpu.memory_space<vmem>>) attributes {dimension_semantics = [#tpu.dimension_semantics<parallel>], iteration_bounds = array<i64: 1>, scalar_prefetch = 0 : i64, scratch_operands = 0 : i64, tpu.core_type = #tpu.core_type<tc>, window_params = [{transform_indices = @transform_0, window_bounds = array<i64: 8, 128>}, {pipeline_mode = #tpu.pipeline_mode<synchronous>, transform_indices = @transform_1, window_bounds = array<i64: 64, 128>}, {pipeline_mode = #tpu.pipeline_mode<synchronous>, transform_indices = @transform_2, window_bounds = array<i64: 64, 1>}, {pipeline_mode = #tpu.pipeline_mode<synchronous>, transform_indices = @transform_3, window_bounds = array<i64: 32, 64>}, {pipeline_mode = #tpu.pipeline_mode<synchronous>, transform_indices = @transform_4, window_bounds = array<i64: 32, 1>}, {pipeline_mode = #tpu.pipeline_mode<synchronous>, transform_indices = @transform_5, window_bounds = array<i64: 16, 32>}, {pipeline_mode = #tpu.pipeline_mode<synchronous>, transform_indices = @transform_6, window_bounds = array<i64: 16, 1>}, {pipeline_mode = #tpu.pipeline_mode<synchronous>, transform_indices = @transform_7, window_bounds = array<i64: 8, 16>}, {pipeline_mode = #tpu.pipeline_mode<synchronous>, transform_indices = @transform_8, window_bounds = array<i64: 8, 1>}, {pipeline_mode = #tpu.pipeline_mode<synchronous>, transform_indices = @transform_9, window_bounds = array<i64: 4, 8>}, {pipeline_mode = #tpu.pipeline_mode<synchronous>, transform_indices = @transform_10, window_bounds = array<i64: 4, 1>}, {pipeline_mode = #tpu.pipeline_mode<synchronous>, transform_indices = @transform_11, window_bounds = array<i64: 2, 4>}, {pipeline_mode = #tpu.pipeline_mode<synchronous>, transform_indices = @transform_12, window_bounds = array<i64: 2, 1>}, {transform_indices = @transform_13, window_bounds = array<i64: 2, 8>}]} {
    %c0 = arith.constant 0 : index
    %c0_0 = arith.constant 0 : index
    %0 = vector.load %arg2[%c0, %c0_0] : memref<64x128xf32, #tpu.memory_space<vmem>>, vector<64x128xf32>
    %c0_1 = arith.constant 0 : index
    %c0_2 = arith.constant 0 : index
    %1 = vector.load %arg1[%c0_1, %c0_2] : memref<8x128xf32, #tpu.memory_space<vmem>>, vector<8x128xf32>
    %cst = arith.constant dense<0.000000e+00> : vector<64x8xf32>
    %2 = tpu.matmul %0, %1, %cst {dimension_numbers = #tpu.dot_dimension_numbers<[1], [1], [0], [0], [0, 0, 1, 0], [], []>} : vector<64x128xf32>, vector<8x128xf32>, vector<64x8xf32> -> vector<64x8xf32>
    %c0_3 = arith.constant 0 : index
    %c0_4 = arith.constant 0 : index
    %3 = vector.load %arg3[%c0_3, %c0_4] : memref<64x1xf32, #tpu.memory_space<vmem>>, vector<64x1xf32>
    %4 = vector.broadcast %3 : vector<64x1xf32> to vector<64x8xf32>
    %5 = arith.addf %2, %4 : vector<64x8xf32>
    %cst_5 = arith.constant 0.000000e+00 : f32
    %6 = vector.broadcast %cst_5 : f32 to vector<64x8xf32>
    %7 = arith.maximumf %5, %6 : vector<64x8xf32>
    %8 = arith.truncf %7 : vector<64x8xf32> to vector<64x8xbf16>
    %c0_6 = arith.constant 0 : index
    %c0_7 = arith.constant 0 : index
    %9 = vector.load %arg4[%c0_6, %c0_7] : memref<32x64xbf16, #tpu.memory_space<vmem>>, vector<32x64xbf16>
    %cst_8 = arith.constant dense<0.000000e+00> : vector<32x8xf32>
    %10 = tpu.matmul %9, %8, %cst_8 {dimension_numbers = #tpu.dot_dimension_numbers<[1], [0], [0], [1], [0, 0, 1, 1], [], []>} : vector<32x64xbf16>, vector<64x8xbf16>, vector<32x8xf32> -> vector<32x8xf32>
    %c0_9 = arith.constant 0 : index
    %c0_10 = arith.constant 0 : index
    %11 = vector.load %arg5[%c0_9, %c0_10] : memref<32x1xf32, #tpu.memory_space<vmem>>, vector<32x1xf32>
    %12 = vector.broadcast %11 : vector<32x1xf32> to vector<32x8xf32>
    %13 = arith.addf %10, %12 : vector<32x8xf32>
    %cst_11 = arith.constant 0.000000e+00 : f32
    %14 = vector.broadcast %cst_11 : f32 to vector<32x8xf32>
    %15 = arith.maximumf %13, %14 : vector<32x8xf32>
    %16 = arith.truncf %15 : vector<32x8xf32> to vector<32x8xbf16>
    %c0_12 = arith.constant 0 : index
    %c0_13 = arith.constant 0 : index
    %17 = vector.load %arg6[%c0_12, %c0_13] : memref<16x32xbf16, #tpu.memory_space<vmem>>, vector<16x32xbf16>
    %cst_14 = arith.constant dense<0.000000e+00> : vector<16x8xf32>
    %18 = tpu.matmul %17, %16, %cst_14 {dimension_numbers = #tpu.dot_dimension_numbers<[1], [0], [0], [1], [0, 0, 1, 1], [], []>} : vector<16x32xbf16>, vector<32x8xbf16>, vector<16x8xf32> -> vector<16x8xf32>
    %c0_15 = arith.constant 0 : index
    %c0_16 = arith.constant 0 : index
    %19 = vector.load %arg7[%c0_15, %c0_16] : memref<16x1xf32, #tpu.memory_space<vmem>>, vector<16x1xf32>
    %20 = vector.broadcast %19 : vector<16x1xf32> to vector<16x8xf32>
    %21 = arith.addf %18, %20 : vector<16x8xf32>
    %cst_17 = arith.constant 0.000000e+00 : f32
    %22 = vector.broadcast %cst_17 : f32 to vector<16x8xf32>
    %23 = arith.maximumf %21, %22 : vector<16x8xf32>
    %24 = arith.truncf %23 : vector<16x8xf32> to vector<16x8xbf16>
    %c0_18 = arith.constant 0 : index
    %c0_19 = arith.constant 0 : index
    %25 = vector.load %arg8[%c0_18, %c0_19] : memref<8x16xbf16, #tpu.memory_space<vmem>>, vector<8x16xbf16>
    %cst_20 = arith.constant dense<0.000000e+00> : vector<8x8xf32>
    %26 = tpu.matmul %25, %24, %cst_20 {dimension_numbers = #tpu.dot_dimension_numbers<[1], [0], [0], [1], [0, 0, 1, 1], [], []>} : vector<8x16xbf16>, vector<16x8xbf16>, vector<8x8xf32> -> vector<8x8xf32>
    %c0_21 = arith.constant 0 : index
    %c0_22 = arith.constant 0 : index
    %27 = vector.load %arg9[%c0_21, %c0_22] : memref<8x1xf32, #tpu.memory_space<vmem>>, vector<8x1xf32>
    %28 = vector.broadcast %27 : vector<8x1xf32> to vector<8x8xf32>
    %29 = arith.addf %26, %28 : vector<8x8xf32>
    %cst_23 = arith.constant 0.000000e+00 : f32
    %30 = vector.broadcast %cst_23 : f32 to vector<8x8xf32>
    %31 = arith.maximumf %29, %30 : vector<8x8xf32>
    %32 = arith.truncf %31 : vector<8x8xf32> to vector<8x8xbf16>
    %c0_24 = arith.constant 0 : index
    %c0_25 = arith.constant 0 : index
    %33 = vector.load %arg10[%c0_24, %c0_25] : memref<4x8xbf16, #tpu.memory_space<vmem>>, vector<4x8xbf16>
    %cst_26 = arith.constant dense<0.000000e+00> : vector<4x8xf32>
    %34 = tpu.matmul %33, %32, %cst_26 {dimension_numbers = #tpu.dot_dimension_numbers<[1], [0], [0], [1], [0, 0, 1, 1], [], []>} : vector<4x8xbf16>, vector<8x8xbf16>, vector<4x8xf32> -> vector<4x8xf32>
    %c0_27 = arith.constant 0 : index
    %c0_28 = arith.constant 0 : index
    %35 = vector.load %arg11[%c0_27, %c0_28] : memref<4x1xf32, #tpu.memory_space<vmem>>, vector<4x1xf32>
    %36 = vector.broadcast %35 : vector<4x1xf32> to vector<4x8xf32>
    %37 = arith.addf %34, %36 : vector<4x8xf32>
    %cst_29 = arith.constant 0.000000e+00 : f32
    %38 = vector.broadcast %cst_29 : f32 to vector<4x8xf32>
    %39 = arith.maximumf %37, %38 : vector<4x8xf32>
    %40 = arith.truncf %39 : vector<4x8xf32> to vector<4x8xbf16>
    %c0_30 = arith.constant 0 : index
    %c0_31 = arith.constant 0 : index
    %41 = vector.load %arg12[%c0_30, %c0_31] : memref<2x4xbf16, #tpu.memory_space<vmem>>, vector<2x4xbf16>
    %cst_32 = arith.constant dense<0.000000e+00> : vector<2x8xf32>
    %42 = tpu.matmul %41, %40, %cst_32 {dimension_numbers = #tpu.dot_dimension_numbers<[1], [0], [0], [1], [0, 0, 1, 1], [], []>} : vector<2x4xbf16>, vector<4x8xbf16>, vector<2x8xf32> -> vector<2x8xf32>
    %c0_33 = arith.constant 0 : index
    %c0_34 = arith.constant 0 : index
    %43 = vector.load %arg13[%c0_33, %c0_34] : memref<2x1xf32, #tpu.memory_space<vmem>>, vector<2x1xf32>
    %44 = vector.broadcast %43 : vector<2x1xf32> to vector<2x8xf32>
    %45 = arith.addf %42, %44 : vector<2x8xf32>
    %c0_35 = arith.constant 0 : index
    %c0_36 = arith.constant 0 : index
    %46 = vector.load %arg14[%c0_35, %c0_36] : memref<2x8xf32, #tpu.memory_space<vmem>>, vector<2x8xf32>
    tpu.vector_store %arg14[%c0_35, %c0_36], %45 {strides = array<i32>} : memref<2x8xf32, #tpu.memory_space<vmem>>, vector<2x8xf32>,
    return
  }
  func.func @transform_0(%arg0: i32) -> (i32, i32) {
    %c0_i32 = arith.constant 0 : i32
    %c0_i32_0 = arith.constant 0 : i32
    return %arg0, %c0_i32 : i32, i32
  }
  func.func @transform_1(%arg0: i32) -> (i32, i32) {
    %c0_i32 = arith.constant 0 : i32
    %c0_i32_0 = arith.constant 0 : i32
    %c0_i32_1 = arith.constant 0 : i32
    return %c0_i32, %c0_i32_0 : i32, i32
  }
  func.func @transform_2(%arg0: i32) -> (i32, i32) {
    %c0_i32 = arith.constant 0 : i32
    %c0_i32_0 = arith.constant 0 : i32
    %c0_i32_1 = arith.constant 0 : i32
    return %c0_i32, %c0_i32_0 : i32, i32
  }
  func.func @transform_3(%arg0: i32) -> (i32, i32) {
    %c0_i32 = arith.constant 0 : i32
    %c0_i32_0 = arith.constant 0 : i32
    %c0_i32_1 = arith.constant 0 : i32
    return %c0_i32, %c0_i32_0 : i32, i32
  }
  func.func @transform_4(%arg0: i32) -> (i32, i32) {
    %c0_i32 = arith.constant 0 : i32
    %c0_i32_0 = arith.constant 0 : i32
    %c0_i32_1 = arith.constant 0 : i32
    return %c0_i32, %c0_i32_0 : i32, i32
  }
  func.func @transform_5(%arg0: i32) -> (i32, i32) {
    %c0_i32 = arith.constant 0 : i32
    %c0_i32_0 = arith.constant 0 : i32
    %c0_i32_1 = arith.constant 0 : i32
    return %c0_i32, %c0_i32_0 : i32, i32
  }
  func.func @transform_6(%arg0: i32) -> (i32, i32) {
    %c0_i32 = arith.constant 0 : i32
    %c0_i32_0 = arith.constant 0 : i32
    %c0_i32_1 = arith.constant 0 : i32
    return %c0_i32, %c0_i32_0 : i32, i32
  }
  func.func @transform_7(%arg0: i32) -> (i32, i32) {
    %c0_i32 = arith.constant 0 : i32
    %c0_i32_0 = arith.constant 0 : i32
    %c0_i32_1 = arith.constant 0 : i32
    return %c0_i32, %c0_i32_0 : i32, i32
  }
  func.func @transform_8(%arg0: i32) -> (i32, i32) {
    %c0_i32 = arith.constant 0 : i32
    %c0_i32_0 = arith.constant 0 : i32
    %c0_i32_1 = arith.constant 0 : i32
    return %c0_i32, %c0_i32_0 : i32, i32
  }
  func.func @transform_9(%arg0: i32) -> (i32, i32) {
    %c0_i32 = arith.constant 0 : i32
    %c0_i32_0 = arith.constant 0 : i32
    %c0_i32_1 = arith.constant 0 : i32
    return %c0_i32, %c0_i32_0 : i32, i32
  }
  func.func @transform_10(%arg0: i32) -> (i32, i32) {
    %c0_i32 = arith.constant 0 : i32
    %c0_i32_0 = arith.constant 0 : i32
    %c0_i32_1 = arith.constant 0 : i32
    return %c0_i32, %c0_i32_0 : i32, i32
  }
  func.func @transform_11(%arg0: i32) -> (i32, i32) {
    %c0_i32 = arith.constant 0 : i32
    %c0_i32_0 = arith.constant 0 : i32
    %c0_i32_1 = arith.constant 0 : i32
    return %c0_i32, %c0_i32_0 : i32, i32
  }
  func.func @transform_12(%arg0: i32) -> (i32, i32) {
    %c0_i32 = arith.constant 0 : i32
    %c0_i32_0 = arith.constant 0 : i32
    %c0_i32_1 = arith.constant 0 : i32
    return %c0_i32, %c0_i32_0 : i32, i32
  }
  func.func @transform_13(%arg0: i32) -> (i32, i32) {
    %c0_i32 = arith.constant 0 : i32
    %c0_i32_0 = arith.constant 0 : i32
    return %c0_i32, %arg0 : i32, i32
  }
}

</mosaic_0001>

<llo_original>
// kernel: tpu_custom_call.1
$region0: #{tpu_custom_call.1}
  #allocation0 [shape = 'u32[]', space=smem, size = 0x4, offset = 0x4, fixed_abs, tag = 'smem constant byte address 0x4 - core index']
  #allocation1 [shape = 'u32[144,128]{1,0:T(1,128)}', space=vmem, size = 0x12000, scoped, tag = 'internal scratch']
  %s0 = inlined_call_operand.vmem [shape: f32[8,128], index: 0, kind: input, shape index: {}]
  %s1 = inlined_call_operand.vmem [shape: f32[64,128], index: 1, kind: input, shape index: {}]
  %s2 = inlined_call_operand.vmem [shape: f32[64,1], index: 2, kind: input, shape index: {}]
  %s3 = inlined_call_operand.vmem [shape: bf16[32,64], index: 3, kind: input, shape index: {}]
  %s4 = inlined_call_operand.vmem [shape: f32[32,1], index: 4, kind: input, shape index: {}]
  %s5 = inlined_call_operand.vmem [shape: bf16[16,32], index: 5, kind: input, shape index: {}]
  %s6 = inlined_call_operand.vmem [shape: f32[16,1], index: 6, kind: input, shape index: {}]
  %s7 = inlined_call_operand.vmem [shape: bf16[8,16], index: 7, kind: input, shape index: {}]
  %s8 = inlined_call_operand.vmem [shape: f32[8,1], index: 8, kind: input, shape index: {}]
  %s9 = inlined_call_operand.vmem [shape: bf16[4,8], index: 9, kind: input, shape index: {}]
  %s10 = inlined_call_operand.vmem [shape: f32[4,1], index: 10, kind: input, shape index: {}]
  %s11 = inlined_call_operand.vmem [shape: bf16[2,4], index: 11, kind: input, shape index: {}]
  %s12 = inlined_call_operand.vmem [shape: f32[2,1], index: 12, kind: input, shape index: {}]
  %s13 = inlined_call_operand.hbm [shape: f32[2,8], index: 13, kind: output, shape index: {}]
  %s14 = sld [smem:[#allocation0]]
  $region62: #{tpu_custom_call.1} parent=0
    _
  %s16 = ssub.s32 1, %s14
  %s17 = scalar_select 0, %s16, %s14
  $region1: #{tpu_custom_call.1} parent=0
    #allocation2 [shape = 'u8[1024]{0}', space=vmem, size = 0x400, scoped, tag = 'output window, operand 0, single buffered']
    #allocation3 [shape = 's32[1]{0}', space=sflag, size = 0x4, scoped, tag = 'scoped memory for tpu_custom_call.1']
    %18 = vsyncpa [#allocation3], 0
    // Predicated region
    $region2: #{tpu_custom_call.1} parent=1 // pred_check
      _
    $region3: #{tpu_custom_call.1} parent=1 // pred_check_branch
      %20 = sbr.rel (0) target = $region5
    $region4: #{tpu_custom_call.1} parent=1 // pred_region
      _
    $region5: #{tpu_custom_call.1} parent=1 // pred_fallthru
      _
    // Predicated region
    $region6: #{tpu_custom_call.1} parent=1 // pred_check
      _
    $region7: #{tpu_custom_call.1} parent=1 // pred_check_branch
      %22 = sbr.rel (0) target = $region9
    $region8: #{tpu_custom_call.1} parent=1 // pred_region
      _
    $region9: #{tpu_custom_call.1} parent=1 // pred_fallthru
      _
    // Predicated region
    $region10: #{tpu_custom_call.1} parent=1 // pred_check
      _
    $region11: #{tpu_custom_call.1} parent=1 // pred_check_branch
      %24 = sbr.rel (0) target = $region13
    $region12: #{tpu_custom_call.1} parent=1 // pred_region
      _
    $region13: #{tpu_custom_call.1} parent=1 // pred_fallthru
      _
    // Predicated region
    $region14: #{tpu_custom_call.1} parent=1 // pred_check
      _
    $region15: #{tpu_custom_call.1} parent=1 // pred_check_branch
      %26 = sbr.rel (0) target = $region17
    $region16: #{tpu_custom_call.1} parent=1 // pred_region
      _
    $region17: #{tpu_custom_call.1} parent=1 // pred_fallthru
      _
    // Predicated region
    $region18: #{tpu_custom_call.1} parent=1 // pred_check
      _
    $region19: #{tpu_custom_call.1} parent=1 // pred_check_branch
      %28 = sbr.rel (0) target = $region21
    $region20: #{tpu_custom_call.1} parent=1 // pred_region
      _
    $region21: #{tpu_custom_call.1} parent=1 // pred_fallthru
      _
    // Predicated region
    $region22: #{tpu_custom_call.1} parent=1 // pred_check
      _
    $region23: #{tpu_custom_call.1} parent=1 // pred_check_branch
      %30 = sbr.rel (0) target = $region25
    $region24: #{tpu_custom_call.1} parent=1 // pred_region
      _
    $region25: #{tpu_custom_call.1} parent=1 // pred_fallthru
      _
    // Predicated region
    $region26: #{tpu_custom_call.1} parent=1 // pred_check
      _
    $region27: #{tpu_custom_call.1} parent=1 // pred_check_branch
      %32 = sbr.rel (0) target = $region29
    $region28: #{tpu_custom_call.1} parent=1 // pred_region
      _
    $region29: #{tpu_custom_call.1} parent=1 // pred_fallthru
      _
    // Predicated region
    $region30: #{tpu_custom_call.1} parent=1 // pred_check
      _
    $region31: #{tpu_custom_call.1} parent=1 // pred_check_branch
      %34 = sbr.rel (0) target = $region33
    $region32: #{tpu_custom_call.1} parent=1 // pred_region
      _
    $region33: #{tpu_custom_call.1} parent=1 // pred_fallthru
      _
    // Predicated region
    $region34: #{tpu_custom_call.1} parent=1 // pred_check
      _
    $region35: #{tpu_custom_call.1} parent=1 // pred_check_branch
      %36 = sbr.rel (0) target = $region37
    $region36: #{tpu_custom_call.1} parent=1 // pred_region
      _
    $region37: #{tpu_custom_call.1} parent=1 // pred_fallthru
      _
    // Predicated region
    $region38: #{tpu_custom_call.1} parent=1 // pred_check
      _
    $region39: #{tpu_custom_call.1} parent=1 // pred_check_branch
      %38 = sbr.rel (0) target = $region41
    $region40: #{tpu_custom_call.1} parent=1 // pred_region
      _
    $region41: #{tpu_custom_call.1} parent=1 // pred_fallthru
      _
    // Predicated region
    $region42: #{tpu_custom_call.1} parent=1 // pred_check
      _
    $region43: #{tpu_custom_call.1} parent=1 // pred_check_branch
      %40 = sbr.rel (0) target = $region45
    $region44: #{tpu_custom_call.1} parent=1 // pred_region
      _
    $region45: #{tpu_custom_call.1} parent=1 // pred_fallthru
      _
    // Predicated region
    $region46: #{tpu_custom_call.1} parent=1 // pred_check
      _
    $region47: #{tpu_custom_call.1} parent=1 // pred_check_branch
      %42 = sbr.rel (0) target = $region49
    $region48: #{tpu_custom_call.1} parent=1 // pred_region
      _
    $region49: #{tpu_custom_call.1} parent=1 // pred_fallthru
      _
    // Predicated region
    $region50: #{tpu_custom_call.1} parent=1 // pred_check
      _
    $region51: #{tpu_custom_call.1} parent=1 // pred_check_branch
      %44 = sbr.rel (0) target = $region53
    $region52: #{tpu_custom_call.1} parent=1 // pred_region
      _
    $region53: #{tpu_custom_call.1} parent=1 // pred_fallthru
      _
    %v46 = vld [vmem:[%s1] sm:$0xff]
    %v47 = vld [vmem:[%s1 + $0x8] sm:$0xff]
    %v48 = vld [vmem:[%s1 + $0x10] sm:$0xff]
    %v49 = vld [vmem:[%s1 + $0x18] sm:$0xff]
    %v50 = vld [vmem:[%s1 + $0x20] sm:$0xff]
    %v51 = vld [vmem:[%s1 + $0x28] sm:$0xff]
    %v52 = vld [vmem:[%s1 + $0x30] sm:$0xff]
    %v53 = vld [vmem:[%s1 + $0x38] sm:$0xff]
    %v54 = vld [vmem:[%s0] sm:$0xff]
    %v55 = vld [vmem:[%s2] sm:$0xff]
    %v56 = vld [vmem:[%s2 + $0x8] sm:$0xff]
    %v57 = vld [vmem:[%s2 + $0x10] sm:$0xff]
    %v58 = vld [vmem:[%s2 + $0x18] sm:$0xff]
    %v59 = vld [vmem:[%s2 + $0x20] sm:$0xff]
    %v60 = vld [vmem:[%s2 + $0x28] sm:$0xff]
    %v61 = vld [vmem:[%s2 + $0x30] sm:$0xff]
    %v62 = vld [vmem:[%s2 + $0x38] sm:$0xff]
    %64 = vset.pattern.permute.xlu0 0
    %65 = vperm.xlu0 %64, %v55
    %v66 = vpop.permute.xlu0 %65
    %69 = vset.pattern.permute.xlu0 0
    %70 = vperm.xlu0 %69, %v56
    %v71 = vpop.permute.xlu0 %70
    %74 = vset.pattern.permute.xlu0 0
    %75 = vperm.xlu0 %74, %v57
    %v76 = vpop.permute.xlu0 %75
    %79 = vset.pattern.permute.xlu0 0
    %80 = vperm.xlu0 %79, %v58
    %v81 = vpop.permute.xlu0 %80
    %84 = vset.pattern.permute.xlu0 0
    %85 = vperm.xlu0 %84, %v59
    %v86 = vpop.permute.xlu0 %85
    %89 = vset.pattern.permute.xlu0 0
    %90 = vperm.xlu0 %89, %v60
    %v91 = vpop.permute.xlu0 %90
    %94 = vset.pattern.permute.xlu0 0
    %95 = vperm.xlu0 %94, %v61
    %v96 = vpop.permute.xlu0 %95
    %99 = vset.pattern.permute.xlu0 0
    %100 = vperm.xlu0 %99, %v62
    %v101 = vpop.permute.xlu0 %100
    %103 = vmatprep.subr.mxu0 0.0
    %104 = vmatpush1.xpose.msra.mxu0 0.0
    %105 = vmatprep.subr.mxu0 0.0
    %106 = vmatpush1.xpose.msra.mxu0 0.0
    %107 = vmatprep.subr.mxu0 0.0
    %108 = vmatpush1.xpose.msra.mxu0 0.0
    %109 = vmatprep.subr.mxu0 0.0
    %110 = vmatpush1.xpose.msra.mxu0 0.0
    %111 = vmatprep.subr.mxu0 0.0
    %112 = vmatpush1.xpose.msra.mxu0 0.0
    %113 = vmatprep.subr.mxu0 0.0
    %114 = vmatpush1.xpose.msra.mxu0 0.0
    %115 = vmatprep.subr.mxu0 0.0
    %116 = vmatpush1.xpose.msra.mxu0 0.0
    %117 = vmatprep.subr.mxu0 0.0
    %118 = vmatpush1.xpose.msra.mxu0 0.0
    %119 = vmatprep.subr.mxu0 0.0
    %120 = vmatpush1.xpose.msra.mxu0 0.0
    %121 = vmatprep.subr.mxu0 0.0
    %122 = vmatpush1.xpose.msra.mxu0 0.0
    %123 = vmatprep.subr.mxu0 0.0
    %124 = vmatpush1.xpose.msra.mxu0 0.0
    %125 = vmatprep.subr.mxu0 0.0
    %126 = vmatpush1.xpose.msra.mxu0 0.0
    %127 = vmatprep.subr.mxu0 0.0
    %128 = vmatpush1.xpose.msra.mxu0 0.0
    %129 = vmatprep.subr.mxu0 0.0
    %130 = vmatpush1.xpose.msra.mxu0 0.0
    %131 = vmatprep.subr.mxu0 0.0
    %132 = vmatpush1.xpose.msra.mxu0 0.0
    %133 = vmatprep.subr.mxu0 0.0
    %134 = vmatpush1.xpose.msra.mxu0 %v54
    %135 = vmatprep.subr.mxu0 0.0
    %136 = vmatpush2.xpose.msra.mxu0 0.0
    %137 = vmatprep.subr.mxu0 0.0
    %138 = vmatpush2.xpose.msra.mxu0 0.0
    %139 = vmatprep.subr.mxu0 0.0
    %140 = vmatpush2.xpose.msra.mxu0 0.0
    %141 = vmatprep.subr.mxu0 0.0
    %142 = vmatpush2.xpose.msra.mxu0 0.0
    %143 = vmatprep.subr.mxu0 0.0
    %144 = vmatpush2.xpose.msra.mxu0 0.0
    %145 = vmatprep.subr.mxu0 0.0
    %146 = vmatpush2.xpose.msra.mxu0 0.0
    %147 = vmatprep.subr.mxu0 0.0
    %148 = vmatpush2.xpose.msra.mxu0 0.0
    %149 = vmatprep.subr.mxu0 0.0
    %150 = vmatpush2.xpose.msra.mxu0 0.0
    %151 = vmatprep.subr.mxu0 0.0
    %152 = vmatpush2.xpose.msra.mxu0 0.0
    %153 = vmatprep.subr.mxu0 0.0
    %154 = vmatpush2.xpose.msra.mxu0 0.0
    %155 = vmatprep.subr.mxu0 0.0
    %156 = vmatpush2.xpose.msra.mxu0 0.0
    %157 = vmatprep.subr.mxu0 0.0
    %158 = vmatpush2.xpose.msra.mxu0 0.0
    %159 = vmatprep.subr.mxu0 0.0
    %160 = vmatpush2.xpose.msra.mxu0 0.0
    %161 = vmatprep.subr.mxu0 0.0
    %162 = vmatpush2.xpose.msra.mxu0 0.0
    %163 = vmatprep.subr.mxu0 0.0
    %164 = vmatpush2.xpose.msra.mxu0 0.0
    %165 = vmatprep.subr.mxu0 0.0
    %166 = vmatpush2.xpose.msra.mxu0 0.0
    %167 = vmatprep.mubr.f32.mxu0 0.0
    %168 = vmatmul.mubr.f32.gmra.mxu0 %v46
    %v169 = vpop.f32.mrf.mxu0
    %v170 = vadd.f32 %v66, %v169
    %v171 = vpop.f32.mrf.mxu0
    %172 = vmatprep.mubr.f32.mxu0 0.0
    %173 = vmatmul.mubr.f32.gmra.mxu0 %v47
    %v174 = vpop.f32.mrf.mxu0
    %v175 = vadd.f32 %v71, %v174
    %v176 = vpop.f32.mrf.mxu0
    %177 = vmatprep.mubr.f32.mxu0 0.0
    %178 = vmatmul.mubr.f32.gmra.mxu0 %v48
    %v179 = vpop.f32.mrf.mxu0
    %v180 = vadd.f32 %v76, %v179
    %v181 = vpop.f32.mrf.mxu0
    %182 = vmatprep.mubr.f32.mxu0 0.0
    %183 = vmatmul.mubr.f32.gmra.mxu0 %v49
    %v184 = vpop.f32.mrf.mxu0
    %v185 = vadd.f32 %v81, %v184
    %v186 = vpop.f32.mrf.mxu0
    %187 = vmatprep.mubr.f32.mxu0 0.0
    %188 = vmatmul.mubr.f32.gmra.mxu0 %v50
    %v189 = vpop.f32.mrf.mxu0
    %v190 = vadd.f32 %v86, %v189
    %v191 = vpop.f32.mrf.mxu0
    %192 = vmatprep.mubr.f32.mxu0 0.0
    %193 = vmatmul.mubr.f32.gmra.mxu0 %v51
    %v194 = vpop.f32.mrf.mxu0
    %v195 = vadd.f32 %v91, %v194
    %v196 = vpop.f32.mrf.mxu0
    %197 = vmatprep.mubr.f32.mxu0 0.0
    %198 = vmatmul.mubr.f32.gmra.mxu0 %v52
    %v199 = vpop.f32.mrf.mxu0
    %v200 = vadd.f32 %v96, %v199
    %v201 = vpop.f32.mrf.mxu0
    %202 = vmatprep.mubr.f32.mxu0 0.0
    %203 = vmatmul.mubr.f32.gmra.mxu0 %v53
    %v204 = vpop.f32.mrf.mxu0
    %v205 = vadd.f32 %v101, %v204
    %v206 = vpop.f32.mrf.mxu0
    %207 = vdwg.mxu0
    %v208 = vmax.f32 %v170, 0.0
    %v209 = vmax.f32 %v175, 0.0
    %v210 = vmax.f32 %v180, 0.0
    %v211 = vmax.f32 %v185, 0.0
    %v212 = vmax.f32 %v190, 0.0
    %v213 = vmax.f32 %v195, 0.0
    %v214 = vmax.f32 %v200, 0.0
    %v215 = vmax.f32 %v205, 0.0
    %v216 = vpack.c.bf16 %v209, %v208
    %v217 = vpack.c.bf16 %v211, %v210
    %v218 = vpack.c.bf16 %v213, %v212
    %v219 = vpack.c.bf16 %v215, %v214
    %v220 = vld [vmem:[%s3] sm:$0xf]
    %v221 = vld [vmem:[%s3 + $0x4] sm:$0xf]
    %v222 = vld [vmem:[%s3 + $0x8] sm:$0xf]
    %v223 = vld [vmem:[%s3 + $0xc] sm:$0xf]
    %v224 = vld [vmem:[%s4] sm:$0xff]
    %v225 = vld [vmem:[%s4 + $0x8] sm:$0xff]
    %v226 = vld [vmem:[%s4 + $0x10] sm:$0xff]
    %v227 = vld [vmem:[%s4 + $0x18] sm:$0xff]
    %229 = vset.pattern.permute.xlu0 0
    %230 = vperm.xlu0 %229, %v224
    %v231 = vpop.permute.xlu0 %230
    %234 = vset.pattern.permute.xlu0 0
    %235 = vperm.xlu0 %234, %v225
    %v236 = vpop.permute.xlu0 %235
    %239 = vset.pattern.permute.xlu0 0
    %240 = vperm.xlu0 %239, %v226
    %v241 = vpop.permute.xlu0 %240
    %244 = vset.pattern.permute.xlu0 0
    %245 = vperm.xlu0 %244, %v227
    %v246 = vpop.permute.xlu0 %245
    %v252 = vunpack.c.l.b16 %v220
    %v253 = vunpack.c.l.b16 %v221
    %v254 = vunpack.c.l.b16 %v222
    %v255 = vunpack.c.l.b16 %v223
    %v256 = vpack.c.b16 %v253, %v252
    %v257 = vpack.c.b16 %v255, %v254
    %vm258 = vcmask 523264
    %v260 = vsel %vm258, %v256, 0
    %v263 = vsel %vm258, %v257, 0
    %265 = vmatprep.subr.bf16.mxu0 0
    %266 = vmatpush1.bf16.msra.mxu0 0
    %267 = vmatprep.subr.bf16.mxu0 0
    %268 = vmatpush1.bf16.msra.mxu0 0
    %269 = vmatprep.subr.bf16.mxu0 0
    %270 = vmatpush1.bf16.msra.mxu0 0
    %271 = vmatprep.subr.bf16.mxu0 0
    %272 = vmatpush1.bf16.msra.mxu0 0
    %273 = vmatprep.subr.bf16.mxu0 0
    %274 = vmatpush1.bf16.msra.mxu0 %v219
    %275 = vmatprep.subr.bf16.mxu0 0
    %276 = vmatpush1.bf16.msra.mxu0 %v218
    %277 = vmatprep.subr.bf16.mxu0 0
    %278 = vmatpush1.bf16.msra.mxu0 %v217
    %279 = vmatprep.subr.bf16.mxu0 0
    %280 = vmatpush1.bf16.msra.mxu0 %v216
    %281 = vmatprep.subr.bf16.mxu0 0
    %282 = vmatpush2.bf16.msra.mxu0 0
    %283 = vmatprep.subr.bf16.mxu0 0
    %284 = vmatpush2.bf16.msra.mxu0 0
    %285 = vmatprep.subr.bf16.mxu0 0
    %286 = vmatpush2.bf16.msra.mxu0 0
    %287 = vmatprep.subr.bf16.mxu0 0
    %288 = vmatpush2.bf16.msra.mxu0 0
    %289 = vmatprep.subr.bf16.mxu0 0
    %290 = vmatpush2.bf16.msra.mxu0 0
    %291 = vmatprep.subr.bf16.mxu0 0
    %292 = vmatpush2.bf16.msra.mxu0 0
    %293 = vmatprep.subr.bf16.mxu0 0
    %294 = vmatpush2.bf16.msra.mxu0 0
    %295 = vmatprep.subr.bf16.mxu0 0
    %296 = vmatpush2.bf16.msra.mxu0 0
    %297 = vmatprep.mubr.bf16.mxu0 0
    %298 = vmatmul.mubr.bf16.gmra.mxu0 %v260
    %v299 = vpop.f32.mrf.mxu0
    %v300 = vadd.f32 %v231, %v299
    %v301 = vpop.f32.mrf.mxu0
    %v302 = vpop.f32.mrf.mxu0
    %v303 = vadd.f32 %v236, %v302
    %v304 = vpop.f32.mrf.mxu0
    %305 = vmatprep.mubr.bf16.mxu0 0
    %306 = vmatmul.mubr.bf16.gmra.mxu0 %v263
    %v307 = vpop.f32.mrf.mxu0
    %v308 = vadd.f32 %v241, %v307
    %v309 = vpop.f32.mrf.mxu0
    %v310 = vpop.f32.mrf.mxu0
    %v311 = vadd.f32 %v246, %v310
    %v312 = vpop.f32.mrf.mxu0
    %313 = vdwg.mxu0
    %v314 = vmax.f32 %v300, 0.0
    %v315 = vmax.f32 %v303, 0.0
    %v316 = vmax.f32 %v308, 0.0
    %v317 = vmax.f32 %v311, 0.0
    %v318 = vpack.c.bf16 %v315, %v314
    %v319 = vpack.c.bf16 %v317, %v316
    %v320 = vld [vmem:[%s5] sm:$0xf]
    %v321 = vld [vmem:[%s5 + $0x4] sm:$0xf]
    %v322 = vld [vmem:[%s6] sm:$0xff]
    %v323 = vld [vmem:[%s6 + $0x8] sm:$0xff]
    %325 = vset.pattern.permute.xlu0 0
    %326 = vperm.xlu0 %325, %v322
    %v327 = vpop.permute.xlu0 %326
    %330 = vset.pattern.permute.xlu0 0
    %331 = vperm.xlu0 %330, %v323
    %v332 = vpop.permute.xlu0 %331
    %v336 = vunpack.c.l.b16 %v320
    %v337 = vunpack.c.l.b16 %v321
    %v338 = vpack.c.b16 %v337, %v336
    %vm339 = vcmask 261120
    %v341 = vsel %vm339, %v338, 0
    %343 = vmatprep.subr.bf16.mxu0 0
    %344 = vmatpush1.bf16.msra.mxu0 0
    %345 = vmatprep.subr.bf16.mxu0 0
    %346 = vmatpush1.bf16.msra.mxu0 0
    %347 = vmatprep.subr.bf16.mxu0 0
    %348 = vmatpush1.bf16.msra.mxu0 0
    %349 = vmatprep.subr.bf16.mxu0 0
    %350 = vmatpush1.bf16.msra.mxu0 0
    %351 = vmatprep.subr.bf16.mxu0 0
    %352 = vmatpush1.bf16.msra.mxu0 0
    %353 = vmatprep.subr.bf16.mxu0 0
    %354 = vmatpush1.bf16.msra.mxu0 0
    %355 = vmatprep.subr.bf16.mxu0 0
    %356 = vmatpush1.bf16.msra.mxu0 %v319
    %357 = vmatprep.subr.bf16.mxu0 0
    %358 = vmatpush1.bf16.msra.mxu0 %v318
    %359 = vmatprep.subr.bf16.mxu0 0
    %360 = vmatpush2.bf16.msra.mxu0 0
    %361 = vmatprep.subr.bf16.mxu0 0
    %362 = vmatpush2.bf16.msra.mxu0 0
    %363 = vmatprep.subr.bf16.mxu0 0
    %364 = vmatpush2.bf16.msra.mxu0 0
    %365 = vmatprep.subr.bf16.mxu0 0
    %366 = vmatpush2.bf16.msra.mxu0 0
    %367 = vmatprep.subr.bf16.mxu0 0
    %368 = vmatpush2.bf16.msra.mxu0 0
    %369 = vmatprep.subr.bf16.mxu0 0
    %370 = vmatpush2.bf16.msra.mxu0 0
    %371 = vmatprep.subr.bf16.mxu0 0
    %372 = vmatpush2.bf16.msra.mxu0 0
    %373 = vmatprep.subr.bf16.mxu0 0
    %374 = vmatpush2.bf16.msra.mxu0 0
    %375 = vmatprep.mubr.bf16.mxu0 0
    %376 = vmatmul.mubr.bf16.gmra.mxu0 %v341
    %v377 = vpop.f32.mrf.mxu0
    %v378 = vadd.f32 %v327, %v377
    %v379 = vpop.f32.mrf.mxu0
    %v380 = vpop.f32.mrf.mxu0
    %v381 = vadd.f32 %v332, %v380
    %v382 = vpop.f32.mrf.mxu0
    %383 = vdwg.mxu0
    %v384 = vmax.f32 %v378, 0.0
    %v385 = vmax.f32 %v381, 0.0
    %v386 = vpack.c.bf16 %v385, %v384
    %v387 = vld [vmem:[%s7] sm:$0xf]
    %v388 = vld [vmem:[%s8] sm:$0xff]
    %390 = vset.pattern.permute.xlu0 0
    %391 = vperm.xlu0 %390, %v388
    %v392 = vpop.permute.xlu0 %391
    %vm394 = vcmask 130048
    %v396 = vsel %vm394, %v387, 0
    %398 = vmatprep.subr.bf16.mxu0 0
    %399 = vmatpush1.bf16.msra.mxu0 0
    %400 = vmatprep.subr.bf16.mxu0 0
    %401 = vmatpush1.bf16.msra.mxu0 0
    %402 = vmatprep.subr.bf16.mxu0 0
    %403 = vmatpush1.bf16.msra.mxu0 0
    %404 = vmatprep.subr.bf16.mxu0 0
    %405 = vmatpush1.bf16.msra.mxu0 0
    %406 = vmatprep.subr.bf16.mxu0 0
    %407 = vmatpush1.bf16.msra.mxu0 0
    %408 = vmatprep.subr.bf16.mxu0 0
    %409 = vmatpush1.bf16.msra.mxu0 0
    %410 = vmatprep.subr.bf16.mxu0 0
    %411 = vmatpush1.bf16.msra.mxu0 0
    %412 = vmatprep.subr.bf16.mxu0 0
    %413 = vmatpush1.bf16.msra.mxu0 %v386
    %414 = vmatprep.subr.bf16.mxu0 0
    %415 = vmatpush2.bf16.msra.mxu0 0
    %416 = vmatprep.subr.bf16.mxu0 0
    %417 = vmatpush2.bf16.msra.mxu0 0
    %418 = vmatprep.subr.bf16.mxu0 0
    %419 = vmatpush2.bf16.msra.mxu0 0
    %420 = vmatprep.subr.bf16.mxu0 0
    %421 = vmatpush2.bf16.msra.mxu0 0
    %422 = vmatprep.subr.bf16.mxu0 0
    %423 = vmatpush2.bf16.msra.mxu0 0
    %424 = vmatprep.subr.bf16.mxu0 0
    %425 = vmatpush2.bf16.msra.mxu0 0
    %426 = vmatprep.subr.bf16.mxu0 0
    %427 = vmatpush2.bf16.msra.mxu0 0
    %428 = vmatprep.subr.bf16.mxu0 0
    %429 = vmatpush2.bf16.msra.mxu0 0
    %430 = vmatprep.mubr.bf16.mxu0 0
    %431 = vmatmul.mubr.bf16.gmra.mxu0 %v396
    %v432 = vpop.f32.mrf.mxu0
    %v433 = vadd.f32 %v392, %v432
    %v434 = vpop.f32.mrf.mxu0
    %v435 = vpop.f32.mrf.mxu0
    %v436 = vpop.f32.mrf.mxu0
    %437 = vdwg.mxu0
    %v438 = vmax.f32 %v433, 0.0
    %v439 = vpack.c.bf16 %v438, %v438
    %v440 = vld [vmem:[%s9] sm:$0x3]
    %v441 = vld [vmem:[%s10] sm:$0xf]
    %443 = vset.pattern.permute.xlu0 0
    %444 = vperm.xlu0 %443, %v441
    %v445 = vpop.permute.xlu0 %444
    %vm447 = vcmask 64512
    %v449 = vsel %vm447, %v440, 0
    %vm451 = vcmask 1043456
    %v453 = vsel %vm451, %v439, 0
    %455 = vmatprep.subr.bf16.mxu0 0
    %456 = vmatpush1.bf16.msra.mxu0 0
    %457 = vmatprep.subr.bf16.mxu0 0
    %458 = vmatpush1.bf16.msra.mxu0 0
    %459 = vmatprep.subr.bf16.mxu0 0
    %460 = vmatpush1.bf16.msra.mxu0 0
    %461 = vmatprep.subr.bf16.mxu0 0
    %462 = vmatpush1.bf16.msra.mxu0 0
    %463 = vmatprep.subr.bf16.mxu0 0
    %464 = vmatpush1.bf16.msra.mxu0 0
    %465 = vmatprep.subr.bf16.mxu0 0
    %466 = vmatpush1.bf16.msra.mxu0 0
    %467 = vmatprep.subr.bf16.mxu0 0
    %468 = vmatpush1.bf16.msra.mxu0 0
    %469 = vmatprep.subr.bf16.mxu0 0
    %470 = vmatpush1.bf16.msra.mxu0 %v453
    %471 = vmatprep.subr.bf16.mxu0 0
    %472 = vmatpush2.bf16.msra.mxu0 0
    %473 = vmatprep.subr.bf16.mxu0 0
    %474 = vmatpush2.bf16.msra.mxu0 0
    %475 = vmatprep.subr.bf16.mxu0 0
    %476 = vmatpush2.bf16.msra.mxu0 0
    %477 = vmatprep.subr.bf16.mxu0 0
    %478 = vmatpush2.bf16.msra.mxu0 0
    %479 = vmatprep.subr.bf16.mxu0 0
    %480 = vmatpush2.bf16.msra.mxu0 0
    %481 = vmatprep.subr.bf16.mxu0 0
    %482 = vmatpush2.bf16.msra.mxu0 0
    %483 = vmatprep.subr.bf16.mxu0 0
    %484 = vmatpush2.bf16.msra.mxu0 0
    %485 = vmatprep.subr.bf16.mxu0 0
    %486 = vmatpush2.bf16.msra.mxu0 0
    %487 = vmatprep.mubr.bf16.mxu0 0
    %488 = vmatmul.mubr.bf16.gmra.mxu0 %v449
    %v489 = vpop.f32.mrf.mxu0
    %v490 = vadd.f32 %v445, %v489
    %v491 = vpop.f32.mrf.mxu0
    %v492 = vpop.f32.mrf.mxu0
    %v493 = vpop.f32.mrf.mxu0
    %494 = vdwg.mxu0
    %v495 = vmax.f32 %v490, 0.0
    %v496 = vpack.c.bf16 %v495, %v495
    %v497 = vld [vmem:[%s11] sm:$0x1]
    %v498 = vld [vmem:[%s12] sm:$0x3]
    %500 = vset.pattern.permute.xlu0 0
    %501 = vperm.xlu0 %500, %v498
    %v502 = vpop.permute.xlu0 %501
    %vm504 = vcmask 31744
    %v506 = vsel %vm504, %v497, 0
    %vm508 = vcmask 1041408
    %v510 = vsel %vm508, %v496, 0
    %512 = vmatprep.subr.bf16.mxu0 0
    %513 = vmatpush1.bf16.msra.mxu0 0
    %514 = vmatprep.subr.bf16.mxu0 0
    %515 = vmatpush1.bf16.msra.mxu0 0
    %516 = vmatprep.subr.bf16.mxu0 0
    %517 = vmatpush1.bf16.msra.mxu0 0
    %518 = vmatprep.subr.bf16.mxu0 0
    %519 = vmatpush1.bf16.msra.mxu0 0
    %520 = vmatprep.subr.bf16.mxu0 0
    %521 = vmatpush1.bf16.msra.mxu0 0
    %522 = vmatprep.subr.bf16.mxu0 0
    %523 = vmatpush1.bf16.msra.mxu0 0
    %524 = vmatprep.subr.bf16.mxu0 0
    %525 = vmatpush1.bf16.msra.mxu0 0
    %526 = vmatprep.subr.bf16.mxu0 0
    %527 = vmatpush1.bf16.msra.mxu0 %v510
    %528 = vmatprep.subr.bf16.mxu0 0
    %529 = vmatpush2.bf16.msra.mxu0 0
    %530 = vmatprep.subr.bf16.mxu0 0
    %531 = vmatpush2.bf16.msra.mxu0 0
    %532 = vmatprep.subr.bf16.mxu0 0
    %533 = vmatpush2.bf16.msra.mxu0 0
    %534 = vmatprep.subr.bf16.mxu0 0
    %535 = vmatpush2.bf16.msra.mxu0 0
    %536 = vmatprep.subr.bf16.mxu0 0
    %537 = vmatpush2.bf16.msra.mxu0 0
    %538 = vmatprep.subr.bf16.mxu0 0
    %539 = vmatpush2.bf16.msra.mxu0 0
    %540 = vmatprep.subr.bf16.mxu0 0
    %541 = vmatpush2.bf16.msra.mxu0 0
    %542 = vmatprep.subr.bf16.mxu0 0
    %543 = vmatpush2.bf16.msra.mxu0 0
    %544 = vmatprep.mubr.bf16.mxu0 0
    %545 = vmatmul.mubr.bf16.gmra.mxu0 %v506
    %v546 = vpop.f32.mrf.mxu0
    %v547 = vadd.f32 %v502, %v546
    %v548 = vpop.f32.mrf.mxu0
    %v549 = vpop.f32.mrf.mxu0
    %v550 = vpop.f32.mrf.mxu0
    %551 = vdwg.mxu0
    %vm552 = vcmask 58368
    %553 = vst.msk [vmem:[#allocation2] sm:$0x3] %vm552, %v547
    // Predicated region
    $region54: #{tpu_custom_call.1} parent=1 // pred_check
      _
    $region55: #{tpu_custom_call.1} parent=1 // pred_check_branch
      %555 = sbr.rel (0) target = $region57
    $region56: #{tpu_custom_call.1} parent=1 // pred_region
      %s557 = ssub.s32 32, 32
      %558 = vsyncadd [#allocation3], %s557
      %s560 = sshll.u32 [#allocation2], 4
      %s561 = int_to_ptr.vmem [resolvable:$true] %s560
      %563 = dma.vmem_to_hbm [thread:$0]  %s561, 32, %s13, [#allocation3]
    $region57: #{tpu_custom_call.1} parent=1 // pred_fallthru
      _
    // Predicated region
    $region58: #{tpu_custom_call.1} parent=1 // pred_check
      _
    $region59: #{tpu_custom_call.1} parent=1 // pred_check_branch
      %565 = sbr.rel (0) target = $region61
    $region60: #{tpu_custom_call.1} parent=1 // pred_region
      %566 = dma.done [#allocation3], 32
    $region61: #{tpu_custom_call.1} parent=1 // pred_fallthru
      _
    %567 = vsyncpa [#allocation3], 1

</llo_original>
